<compile_context>
chip_gen: v7x
topology: tpu7x:2x2x1
jax: 0.10.0
libtpu: 0.0.40
codegen_flags: <defaults>
</compile_context>

<pallas_src>
import jax
import jax.numpy as jnp
from jax.experimental import pallas as pl
from jax.experimental.pallas import tpu as pltpu

# ---------------------------------------------------------------------------
# Small shapes consistent with the module.
# ---------------------------------------------------------------------------
N = 64                           # total number of nodes across all graphs
H = 128                          # hidden_dim (lane-dense)
GRAPH_SIZES = (10, 22, 17, 15)   # nodes per graph (sums to N)


# ---------------------------------------------------------------------------
# Fused kernel: attention scores + per-graph (segment) softmax pooling.
# ---------------------------------------------------------------------------
def gap_kernel(x_ref, batch_row_ref, batch_col_ref, w1_ref, b1_ref, w2_ref,
               out_ref):
    x = x_ref[...]                                # (Np, H)  f32 node features
    batch_row = batch_row_ref[...]                # (1,  Np) int32 graph ids
    batch_col = batch_col_ref[...]                # (Np, 1)  int32 graph ids
    n_pad = x.shape[0]
    b_pad = out_ref.shape[0]

    # ---- attention scores: Linear(H,H) -> tanh -> <., w2> ------------------
    # MXU operands in bf16, f32 accumulation; bias add / tanh in f32 (VPU/EUP).
    h = jnp.tanh(
        jnp.dot(x.astype(jnp.bfloat16), w1_ref[...].astype(jnp.bfloat16),
                preferred_element_type=jnp.float32)
        + b1_ref[...])                                              # (Np, H)
    # Lane-dense score path: VPU multiply + XLU lane reduce (keeps MXU free).
    s = jnp.sum(h * w2_ref[...], axis=-1, keepdims=True)           # (Np, 1)

    # ---- per-graph softmax weights (per-segment max shift) -----------------
    gid_col = jax.lax.broadcasted_iota(jnp.int32, (n_pad, b_pad), 1)  # (Np, Bp)
    memberT = batch_col == gid_col                                    # (Np, Bp)

    neg = jnp.float32(-1e30)
    seg_max = jnp.max(jnp.where(memberT, s, neg), axis=0,
                      keepdims=True)                                  # (1, Bp)
    # Members always have s - seg_max <= 0; the min() only guards masked-out
    # non-member / empty-graph entries from overflowing exp before the where.
    e = jnp.where(memberT, jnp.exp(jnp.minimum(s - seg_max, 0.0)),
                  0.0)                                                # (Np, Bp)
    denom = jnp.maximum(jnp.sum(e, axis=0, keepdims=True),
                        jnp.float32(1e-30))                           # (1, Bp)
    w = e / denom                       # exact divide; empty graphs -> zeros
    # Each node belongs to at most one graph -> one softmax weight per node.
    w_node = jnp.sum(w, axis=1, keepdims=True)                        # (Np, 1)

    # ---- pooled[i,:] = sum_n member[i,n] * w_node[n] * x[n,:]  (one matmul)
    gid_row = jax.lax.broadcasted_iota(jnp.int32, (b_pad, n_pad), 0)  # (Bp, Np)
    member = (batch_row == gid_row).astype(jnp.float32) \
                                   .astype(jnp.bfloat16)              # (Bp, Np)
    wx = (w_node * x).astype(jnp.bfloat16)                            # (Np, H)
    pooled = jnp.dot(member, wx, preferred_element_type=jnp.float32)  # (Bp, H)
    out_ref[...] = pooled.astype(out_ref.dtype)


# ---------------------------------------------------------------------------
# Wrapper.
# ---------------------------------------------------------------------------
def global_attention_pooling(params, x, batch, num_graphs):
    n, hdim = x.shape
    n_pad = ((n + 127) // 128) * 128       # lane-multiple node count
    b_pad = ((num_graphs + 7) // 8) * 8    # sublane-multiple graph count

    # Zero-pad nodes; padded ids = -1 match no graph (weight 0 by construction).
    x_p = jnp.pad(x, ((0, n_pad - n), (0, 0)))
    batch_p = jnp.pad(batch.astype(jnp.int32), (0, n_pad - n),
                      constant_values=-1)
    batch_row = batch_p.reshape(1, n_pad)
    batch_col = batch_p.reshape(n_pad, 1)
    w2_row = params["w2"].reshape(1, hdim)     # (H,1) -> lane-dense (1,H)
    # NOTE: b2 is intentionally NOT passed — it cancels exactly in the softmax.

    inputs = [x_p, batch_row, batch_col, params["w1"], params["b1"], w2_row]

    def full_spec(a):
        nd = a.ndim
        return pl.BlockSpec(a.shape, lambda i: (0,) * nd)

    out = pl.pallas_call(
        gap_kernel,
        out_shape=jax.ShapeDtypeStruct((b_pad, hdim), jnp.float32),
        grid_spec=pltpu.PrefetchScalarGridSpec(
            num_scalar_prefetch=0,
            grid=(1,),
            in_specs=[full_spec(a) for a in inputs],
            out_specs=pl.BlockSpec((b_pad, hdim), lambda i: (0, 0)),
        ),
        compiler_params=pltpu.CompilerParams(
            dimension_semantics=("arbitrary",)),
    )(*inputs)
    return out[:num_graphs]


# ---------------------------------------------------------------------------
# Parameters (matmul-ready layout; equivalent to nn.Linear with W_pt = W.T).
# ---------------------------------------------------------------------------
def build_params(key):
    k1, k2, k3, k4 = jax.random.split(key, 4)
    nrm = lambda k, shape: (0.05 * jax.random.normal(k, shape)).astype(jnp.float32)
    return {
        "w1": nrm(k1, (H, H)), "b1": nrm(k2, (1, H)),
        "w2": nrm(k3, (H, 1)), "b2": nrm(k4, (1, 1)),   # b2 used only in reference
    }


# ---------------------------------------------------------------------------
# Pure-JAX reference (mirrors the PyTorch per-graph loop, f32 throughout).
# ---------------------------------------------------------------------------
def reference(params, x, batch, num_graphs):
    h = jnp.tanh(x @ params["w1"] + params["b1"])
    s = (h @ params["w2"] + params["b2"])[:, 0]
    outs = []
    for i in range(num_graphs):
        m = batch == i
        logits = jnp.where(m, s, -jnp.inf)
        w = jax.nn.softmax(logits)
        w = jnp.where(m, w, 0.0)
        outs.append(jnp.sum(x * w[:, None], axis=0))
    return jnp.stack(outs)


# ---------------------------------------------------------------------------
# Main.
# ---------------------------------------------------------------------------
if __name__ == "__main__":
    root = jax.random.PRNGKey(0)
    k_param, k_x = jax.random.split(root, 2)

    params = build_params(k_param)
    x = jax.random.normal(k_x, (N, H), dtype=jnp.float32)
    batch = jnp.concatenate([jnp.full((c,), i, dtype=jnp.int32)
                             for i, c in enumerate(GRAPH_SIZES)])
    num_graphs = int(batch.max()) + 1        # host-side, mirrors .item() + 1

    out = global_attention_pooling(params, x, batch, num_graphs)
    out = jax.block_until_ready(out)

    assert out.shape == (num_graphs, H), out.shape
    assert bool(jnp.all(jnp.isfinite(out)))
    ref = reference(params, x, batch, num_graphs)
    # Tolerance sized for bf16 MXU feeds with f32 accumulation vs. f32 reference.
    assert bool(jnp.allclose(out, ref, atol=2e-2, rtol=2e-2)), \
        float(jnp.max(jnp.abs(out - ref)))
    print("KERNEL_OK")
</pallas_src>

<mosaic_0001>
module attributes {stable_mosaic.version = 11 : i64} {
  func.func @gap_kernel(%arg0: i32, %arg1: memref<128x128xf32, #tpu.memory_space<vmem>>, %arg2: memref<1x128xi32, #tpu.memory_space<vmem>>, %arg3: memref<128x1xi32, #tpu.memory_space<vmem>>, %arg4: memref<128x128xf32, #tpu.memory_space<vmem>>, %arg5: memref<1x128xf32, #tpu.memory_space<vmem>>, %arg6: memref<1x128xf32, #tpu.memory_space<vmem>>, %arg7: memref<8x128xf32, #tpu.memory_space<vmem>>) attributes {dimension_semantics = [#tpu.dimension_semantics<arbitrary>], iteration_bounds = array<i64: 1>, scalar_prefetch = 0 : i64, scratch_operands = 0 : i64, tpu.core_type = #tpu.core_type<tc>, window_params = [{pipeline_mode = #tpu.pipeline_mode<synchronous>, transform_indices = @transform_0, window_bounds = array<i64: 128, 128>}, {pipeline_mode = #tpu.pipeline_mode<synchronous>, transform_indices = @transform_1, window_bounds = array<i64: 1, 128>}, {pipeline_mode = #tpu.pipeline_mode<synchronous>, transform_indices = @transform_2, window_bounds = array<i64: 128, 1>}, {pipeline_mode = #tpu.pipeline_mode<synchronous>, transform_indices = @transform_3, window_bounds = array<i64: 128, 128>}, {pipeline_mode = #tpu.pipeline_mode<synchronous>, transform_indices = @transform_4, window_bounds = array<i64: 1, 128>}, {pipeline_mode = #tpu.pipeline_mode<synchronous>, transform_indices = @transform_5, window_bounds = array<i64: 1, 128>}, {pipeline_mode = #tpu.pipeline_mode<synchronous>, transform_indices = @transform_6, window_bounds = array<i64: 8, 128>}]} {
    %c0 = arith.constant 0 : index
    %c0_0 = arith.constant 0 : index
    %0 = vector.load %arg1[%c0, %c0_0] : memref<128x128xf32, #tpu.memory_space<vmem>>, vector<128x128xf32>
    %c0_1 = arith.constant 0 : index
    %c0_2 = arith.constant 0 : index
    %1 = vector.load %arg2[%c0_1, %c0_2] : memref<1x128xi32, #tpu.memory_space<vmem>>, vector<1x128xi32>
    %c0_3 = arith.constant 0 : index
    %c0_4 = arith.constant 0 : index
    %2 = vector.load %arg3[%c0_3, %c0_4] : memref<128x1xi32, #tpu.memory_space<vmem>>, vector<128x1xi32>
    %3 = arith.truncf %0 : vector<128x128xf32> to vector<128x128xbf16>
    %c0_5 = arith.constant 0 : index
    %c0_6 = arith.constant 0 : index
    %4 = vector.load %arg4[%c0_5, %c0_6] : memref<128x128xf32, #tpu.memory_space<vmem>>, vector<128x128xf32>
    %5 = arith.truncf %4 : vector<128x128xf32> to vector<128x128xbf16>
    %cst = arith.constant dense<0.000000e+00> : vector<128x128xf32>
    %6 = tpu.matmul %3, %5, %cst {dimension_numbers = #tpu.dot_dimension_numbers<[1], [0], [0], [1], [0, 0, 1, 1], [], []>} : vector<128x128xbf16>, vector<128x128xbf16>, vector<128x128xf32> -> vector<128x128xf32>
    %c0_7 = arith.constant 0 : index
    %c0_8 = arith.constant 0 : index
    %7 = vector.load %arg5[%c0_7, %c0_8] : memref<1x128xf32, #tpu.memory_space<vmem>>, vector<1x128xf32>
    %8 = vector.broadcast %7 : vector<1x128xf32> to vector<128x128xf32>
    %9 = arith.addf %6, %8 : vector<128x128xf32>
    %10 = math.tanh %9 : vector<128x128xf32>
    %c0_9 = arith.constant 0 : index
    %c0_10 = arith.constant 0 : index
    %11 = vector.load %arg6[%c0_9, %c0_10] : memref<1x128xf32, #tpu.memory_space<vmem>>, vector<1x128xf32>
    %12 = vector.broadcast %11 : vector<1x128xf32> to vector<128x128xf32>
    %13 = arith.mulf %10, %12 : vector<128x128xf32>
    %cst_11 = arith.constant dense<0.000000e+00> : vector<128xf32>
    %14 = vector.multi_reduction <add>, %13, %cst_11 [1] : vector<128x128xf32> to vector<128xf32>
    %15 = vector.shape_cast %14 : vector<128xf32> to vector<128x1xf32>
    %16 = tpu.iota {dimensions = array<i32: 1>} : vector<128x8xi32>
    %17 = vector.broadcast %2 : vector<128x1xi32> to vector<128x8xi32>
    %18 = arith.cmpi eq, %17, %16 : vector<128x8xi32>
    %cst_12 = arith.constant -1.000000e+30 : f32
    %19 = vector.shape_cast %15 : vector<128x1xf32> to vector<128x1xf32>
    %20 = vector.broadcast %19 : vector<128x1xf32> to vector<128x8xf32>
    %21 = vector.broadcast %cst_12 : f32 to vector<128x8xf32>
    %22 = arith.select %18, %20, %21 : vector<128x8xi1>, vector<128x8xf32>
    %cst_13 = arith.constant dense<0xFF800000> : vector<8xf32>
    %23 = vector.multi_reduction <maximumf>, %22, %cst_13 [0] : vector<128x8xf32> to vector<8xf32>
    %24 = vector.shape_cast %23 : vector<8xf32> to vector<1x8xf32>
    %25 = vector.broadcast %15 : vector<128x1xf32> to vector<128x8xf32>
    %26 = vector.broadcast %24 : vector<1x8xf32> to vector<128x8xf32>
    %27 = arith.subf %25, %26 : vector<128x8xf32>
    %cst_14 = arith.constant 0.000000e+00 : f32
    %28 = vector.broadcast %cst_14 : f32 to vector<128x8xf32>
    %29 = arith.minimumf %27, %28 : vector<128x8xf32>
    %30 = math.exp %29 : vector<128x8xf32>
    %cst_15 = arith.constant 0.000000e+00 : f32
    %31 = vector.broadcast %cst_15 : f32 to vector<128x8xf32>
    %32 = arith.select %18, %30, %31 : vector<128x8xi1>, vector<128x8xf32>
    %cst_16 = arith.constant dense<0.000000e+00> : vector<8xf32>
    %33 = vector.multi_reduction <add>, %32, %cst_16 [0] : vector<128x8xf32> to vector<8xf32>
    %34 = vector.shape_cast %33 : vector<8xf32> to vector<1x8xf32>
    %cst_17 = arith.constant 1.000000e-30 : f32
    %35 = vector.broadcast %cst_17 : f32 to vector<1x8xf32>
    %36 = arith.maximumf %34, %35 : vector<1x8xf32>
    %37 = vector.broadcast %36 : vector<1x8xf32> to vector<128x8xf32>
    %38 = arith.divf %32, %37 : vector<128x8xf32>
    %cst_18 = arith.constant dense<0.000000e+00> : vector<128xf32>
    %39 = vector.multi_reduction <add>, %38, %cst_18 [1] : vector<128x8xf32> to vector<128xf32>
    %40 = vector.shape_cast %39 : vector<128xf32> to vector<128x1xf32>
    %41 = tpu.iota {dimensions = array<i32: 0>} : vector<8x128xi32>
    %42 = vector.broadcast %1 : vector<1x128xi32> to vector<8x128xi32>
    %43 = arith.cmpi eq, %42, %41 : vector<8x128xi32>
    %44 = arith.extui %43 : vector<8x128xi1> to vector<8x128xi32>
    %45 = arith.sitofp %44 : vector<8x128xi32> to vector<8x128xf32>
    %46 = arith.truncf %45 : vector<8x128xf32> to vector<8x128xbf16>
    %47 = vector.broadcast %40 : vector<128x1xf32> to vector<128x128xf32>
    %48 = arith.mulf %47, %0 : vector<128x128xf32>
    %49 = arith.truncf %48 : vector<128x128xf32> to vector<128x128xbf16>
    %cst_19 = arith.constant dense<0.000000e+00> : vector<8x128xf32>
    %50 = tpu.matmul %46, %49, %cst_19 {dimension_numbers = #tpu.dot_dimension_numbers<[1], [0], [0], [1], [0, 0, 1, 1], [], []>} : vector<8x128xbf16>, vector<128x128xbf16>, vector<8x128xf32> -> vector<8x128xf32>
    %c0_20 = arith.constant 0 : index
    %c0_21 = arith.constant 0 : index
    %51 = vector.load %arg7[%c0_20, %c0_21] : memref<8x128xf32, #tpu.memory_space<vmem>>, vector<8x128xf32>
    tpu.vector_store %arg7[%c0_20, %c0_21], %50 {strides = array<i32>} : memref<8x128xf32, #tpu.memory_space<vmem>>, vector<8x128xf32>,
    return
  }
  func.func @transform_0(%arg0: i32) -> (i32, i32) {
    %c0_i32 = arith.constant 0 : i32
    %c0_i32_0 = arith.constant 0 : i32
    %c0_i32_1 = arith.constant 0 : i32
    return %c0_i32, %c0_i32_0 : i32, i32
  }
  func.func @transform_1(%arg0: i32) -> (i32, i32) {
    %c0_i32 = arith.constant 0 : i32
    %c0_i32_0 = arith.constant 0 : i32
    %c0_i32_1 = arith.constant 0 : i32
    return %c0_i32, %c0_i32_0 : i32, i32
  }
  func.func @transform_2(%arg0: i32) -> (i32, i32) {
    %c0_i32 = arith.constant 0 : i32
    %c0_i32_0 = arith.constant 0 : i32
    %c0_i32_1 = arith.constant 0 : i32
    return %c0_i32, %c0_i32_0 : i32, i32
  }
  func.func @transform_3(%arg0: i32) -> (i32, i32) {
    %c0_i32 = arith.constant 0 : i32
    %c0_i32_0 = arith.constant 0 : i32
    %c0_i32_1 = arith.constant 0 : i32
    return %c0_i32, %c0_i32_0 : i32, i32
  }
  func.func @transform_4(%arg0: i32) -> (i32, i32) {
    %c0_i32 = arith.constant 0 : i32
    %c0_i32_0 = arith.constant 0 : i32
    %c0_i32_1 = arith.constant 0 : i32
    return %c0_i32, %c0_i32_0 : i32, i32
  }
  func.func @transform_5(%arg0: i32) -> (i32, i32) {
    %c0_i32 = arith.constant 0 : i32
    %c0_i32_0 = arith.constant 0 : i32
    %c0_i32_1 = arith.constant 0 : i32
    return %c0_i32, %c0_i32_0 : i32, i32
  }
  func.func @transform_6(%arg0: i32) -> (i32, i32) {
    %c0_i32 = arith.constant 0 : i32
    %c0_i32_0 = arith.constant 0 : i32
    %c0_i32_1 = arith.constant 0 : i32
    return %c0_i32, %c0_i32_0 : i32, i32
  }
}

</mosaic_0001>

<llo_original>
// kernel: tpu_custom_call.1
$region0: #{tpu_custom_call.1}
  #allocation0 [shape = 'u32[]', space=smem, size = 0x4, offset = 0x4, fixed_abs, tag = 'smem constant byte address 0x4 - core index']
  #allocation1 [shape = 'u32[144,128]{1,0:T(1,128)}', space=vmem, size = 0x12000, scoped, tag = 'internal scratch']
  %s0 = inlined_call_operand.vmem [shape: f32[128,128], index: 0, kind: input, shape index: {}]
  %s1 = inlined_call_operand.vmem [shape: s32[1,128], index: 1, kind: input, shape index: {}]
  %s2 = inlined_call_operand.vmem [shape: s32[128,1], index: 2, kind: input, shape index: {}]
  %s3 = inlined_call_operand.hbm [shape: f32[128,128], index: 3, kind: input, shape index: {}]
  %s4 = inlined_call_operand.vmem [shape: f32[1,128], index: 4, kind: input, shape index: {}]
  %s5 = inlined_call_operand.vmem [shape: f32[1,128], index: 5, kind: input, shape index: {}]
  %s6 = inlined_call_operand.hbm [shape: f32[8,128], index: 6, kind: output, shape index: {}]
  %s7 = sld [smem:[#allocation0]]
  $region38: #{tpu_custom_call.1} parent=0
    _
  %s9 = ssub.s32 1, %s7
  %s10 = scalar_select 0, %s9, %s7
  $region1: #{tpu_custom_call.1} parent=0
    #allocation2 [shape = 'u8[65536]{0}', space=vmem, size = 0x10000, scoped, tag = 'input window, operand 3, single buffered']
    #allocation3 [shape = 's32[1]{0}', space=sflag, size = 0x4, scoped, tag = 'scoped memory for tpu_custom_call.1']
    #allocation4 [shape = 's32[1]{0}', space=sflag, size = 0x4, scoped, tag = 'scoped memory for tpu_custom_call.1']
    #allocation5 [shape = 'u8[4096]{0}', space=vmem, size = 0x1000, scoped, tag = 'output window, operand 0, single buffered']
    %11 = vsyncpa [#allocation3], 0
    %12 = vsyncpa [#allocation4], 0
    // Predicated region
    $region2: #{tpu_custom_call.1} parent=1 // pred_check
      _
    $region3: #{tpu_custom_call.1} parent=1 // pred_check_branch
      %14 = sbr.rel (0) target = $region5
    $region4: #{tpu_custom_call.1} parent=1 // pred_region
      _
    $region5: #{tpu_custom_call.1} parent=1 // pred_fallthru
      _
    // Predicated region
    $region6: #{tpu_custom_call.1} parent=1 // pred_check
      _
    $region7: #{tpu_custom_call.1} parent=1 // pred_check_branch
      %16 = sbr.rel (0) target = $region9
    $region8: #{tpu_custom_call.1} parent=1 // pred_region
      _
    $region9: #{tpu_custom_call.1} parent=1 // pred_fallthru
      _
    // Predicated region
    $region10: #{tpu_custom_call.1} parent=1 // pred_check
      _
    $region11: #{tpu_custom_call.1} parent=1 // pred_check_branch
      %18 = sbr.rel (0) target = $region13
    $region12: #{tpu_custom_call.1} parent=1 // pred_region
      _
    $region13: #{tpu_custom_call.1} parent=1 // pred_fallthru
      _
    // Predicated region
    $region14: #{tpu_custom_call.1} parent=1 // pred_check
      _
    $region15: #{tpu_custom_call.1} parent=1 // pred_check_branch
      %20 = sbr.rel (0) target = $region17
    $region16: #{tpu_custom_call.1} parent=1 // pred_region
      %s22 = ssub.s32 2048, 2048
      %23 = vsyncadd [#allocation3], %s22
      %s24 = sshll.u32 [#allocation2], 4
      %s25 = int_to_ptr.vmem [resolvable:$true] %s24
      %30 = dma.hbm_to_vmem [thread:$0]  %s3, 2048, %s25, [#allocation3], 128, 128, 8
    $region17: #{tpu_custom_call.1} parent=1 // pred_fallthru
      _
    // Predicated region
    $region18: #{tpu_custom_call.1} parent=1 // pred_check
      _
    $region19: #{tpu_custom_call.1} parent=1 // pred_check_branch
      %32 = sbr.rel (0) target = $region21
    $region20: #{tpu_custom_call.1} parent=1 // pred_region
      _
    $region21: #{tpu_custom_call.1} parent=1 // pred_fallthru
      _
    // Predicated region
    $region22: #{tpu_custom_call.1} parent=1 // pred_check
      _
    $region23: #{tpu_custom_call.1} parent=1 // pred_check_branch
      %34 = sbr.rel (0) target = $region25
    $region24: #{tpu_custom_call.1} parent=1 // pred_region
      _
    $region25: #{tpu_custom_call.1} parent=1 // pred_fallthru
      _
    // Predicated region
    $region26: #{tpu_custom_call.1} parent=1 // pred_check
      _
    $region27: #{tpu_custom_call.1} parent=1 // pred_check_branch
      %36 = sbr.rel (0) target = $region29
    $region28: #{tpu_custom_call.1} parent=1 // pred_region
      %37 = dma.done [#allocation3], 2048
    $region29: #{tpu_custom_call.1} parent=1 // pred_fallthru
      _
    %v39 = vld [vmem:[%s0] sm:$0xff]
    %v40 = vld [vmem:[%s0 + $0x8] sm:$0xff]
    %v41 = vld [vmem:[%s0 + $0x10] sm:$0xff]
    %v42 = vld [vmem:[%s0 + $0x18] sm:$0xff]
    %v43 = vld [vmem:[%s0 + $0x20] sm:$0xff]
    %v44 = vld [vmem:[%s0 + $0x28] sm:$0xff]
    %v45 = vld [vmem:[%s0 + $0x30] sm:$0xff]
    %v46 = vld [vmem:[%s0 + $0x38] sm:$0xff]
    %v47 = vld [vmem:[%s0 + $0x40] sm:$0xff]
    %v48 = vld [vmem:[%s0 + $0x48] sm:$0xff]
    %v49 = vld [vmem:[%s0 + $0x50] sm:$0xff]
    %v50 = vld [vmem:[%s0 + $0x58] sm:$0xff]
    %v51 = vld [vmem:[%s0 + $0x60] sm:$0xff]
    %v52 = vld [vmem:[%s0 + $0x68] sm:$0xff]
    %v53 = vld [vmem:[%s0 + $0x70] sm:$0xff]
    %v54 = vld [vmem:[%s0 + $0x78] sm:$0xff]
    %v55 = vld [vmem:[%s1] sm:$0x1]
    %v56 = vld [vmem:[%s2] sm:$0xff]
    %v57 = vld [vmem:[%s2 + $0x8] sm:$0xff]
    %v58 = vld [vmem:[%s2 + $0x10] sm:$0xff]
    %v59 = vld [vmem:[%s2 + $0x18] sm:$0xff]
    %v60 = vld [vmem:[%s2 + $0x20] sm:$0xff]
    %v61 = vld [vmem:[%s2 + $0x28] sm:$0xff]
    %v62 = vld [vmem:[%s2 + $0x30] sm:$0xff]
    %v63 = vld [vmem:[%s2 + $0x38] sm:$0xff]
    %v64 = vld [vmem:[%s2 + $0x40] sm:$0xff]
    %v65 = vld [vmem:[%s2 + $0x48] sm:$0xff]
    %v66 = vld [vmem:[%s2 + $0x50] sm:$0xff]
    %v67 = vld [vmem:[%s2 + $0x58] sm:$0xff]
    %v68 = vld [vmem:[%s2 + $0x60] sm:$0xff]
    %v69 = vld [vmem:[%s2 + $0x68] sm:$0xff]
    %v70 = vld [vmem:[%s2 + $0x70] sm:$0xff]
    %v71 = vld [vmem:[%s2 + $0x78] sm:$0xff]
    %v72 = vpack.c.bf16 %v40, %v39
    %v73 = vpack.c.bf16 %v42, %v41
    %v74 = vpack.c.bf16 %v44, %v43
    %v75 = vpack.c.bf16 %v46, %v45
    %v76 = vpack.c.bf16 %v48, %v47
    %v77 = vpack.c.bf16 %v50, %v49
    %v78 = vpack.c.bf16 %v52, %v51
    %v79 = vpack.c.bf16 %v54, %v53
    %v80 = vld [vmem:[#allocation2] sm:$0xff]
    %v81 = vld [vmem:[#allocation2 + $0x8] sm:$0xff]
    %v82 = vld [vmem:[#allocation2 + $0x10] sm:$0xff]
    %v83 = vld [vmem:[#allocation2 + $0x18] sm:$0xff]
    %v84 = vld [vmem:[#allocation2 + $0x20] sm:$0xff]
    %v85 = vld [vmem:[#allocation2 + $0x28] sm:$0xff]
    %v86 = vld [vmem:[#allocation2 + $0x30] sm:$0xff]
    %v87 = vld [vmem:[#allocation2 + $0x38] sm:$0xff]
    %v88 = vld [vmem:[#allocation2 + $0x40] sm:$0xff]
    %v89 = vld [vmem:[#allocation2 + $0x48] sm:$0xff]
    %v90 = vld [vmem:[#allocation2 + $0x50] sm:$0xff]
    %v91 = vld [vmem:[#allocation2 + $0x58] sm:$0xff]
    %v92 = vld [vmem:[#allocation2 + $0x60] sm:$0xff]
    %v93 = vld [vmem:[#allocation2 + $0x68] sm:$0xff]
    %v94 = vld [vmem:[#allocation2 + $0x70] sm:$0xff]
    %v95 = vld [vmem:[#allocation2 + $0x78] sm:$0xff]
    %v96 = vpack.c.bf16 %v81, %v80
    %v97 = vpack.c.bf16 %v83, %v82
    %v98 = vpack.c.bf16 %v85, %v84
    %v99 = vpack.c.bf16 %v87, %v86
    %v100 = vpack.c.bf16 %v89, %v88
    %v101 = vpack.c.bf16 %v91, %v90
    %v102 = vpack.c.bf16 %v93, %v92
    %v103 = vpack.c.bf16 %v95, %v94
    %v104 = vld [vmem:[%s4] sm:$0x1]
    %v106 = vlaneseq
    %v107 = vshrl.u32 %v106, 7
    %v108 = vsub.s32 0, %v107
    %v109 = vrot.slane %v104, %v108
    %111 = vmatprep.subr.bf16.mxu0 0
    %112 = vmatpush1.bf16.msra.mxu0 %v96
    %113 = vmatprep.subr.bf16.mxu0 0
    %114 = vmatpush1.bf16.msra.mxu0 %v97
    %115 = vmatprep.subr.bf16.mxu0 0
    %116 = vmatpush1.bf16.msra.mxu0 %v98
    %117 = vmatprep.subr.bf16.mxu0 0
    %118 = vmatpush1.bf16.msra.mxu0 %v99
    %119 = vmatprep.subr.bf16.mxu0 0
    %120 = vmatpush1.bf16.msra.mxu0 %v100
    %121 = vmatprep.subr.bf16.mxu0 0
    %122 = vmatpush1.bf16.msra.mxu0 %v101
    %123 = vmatprep.subr.bf16.mxu0 0
    %124 = vmatpush1.bf16.msra.mxu0 %v102
    %125 = vmatprep.subr.bf16.mxu0 0
    %126 = vmatpush1.bf16.msra.mxu0 %v103
    %127 = vmatprep.subr.bf16.mxu0 0
    %128 = vmatpush1.bf16.msra.mxu0 0
    %129 = vmatprep.subr.bf16.mxu0 0
    %130 = vmatpush1.bf16.msra.mxu0 0
    %131 = vmatprep.subr.bf16.mxu0 0
    %132 = vmatpush1.bf16.msra.mxu0 0
    %133 = vmatprep.subr.bf16.mxu0 0
    %134 = vmatpush1.bf16.msra.mxu0 0
    %135 = vmatprep.subr.bf16.mxu0 0
    %136 = vmatpush1.bf16.msra.mxu0 0
    %137 = vmatprep.subr.bf16.mxu0 0
    %138 = vmatpush1.bf16.msra.mxu0 0
    %139 = vmatprep.subr.bf16.mxu0 0
    %140 = vmatpush1.bf16.msra.mxu0 0
    %141 = vmatprep.subr.bf16.mxu0 0
    %142 = vmatpush1.bf16.msra.mxu0 0
    %143 = vmatprep.mubr.bf16.mxu0 0
    %144 = vmatmul.mubr.bf16.gmra.mrb[0].mxu0 %v72
    %v145 = vpop.f32.mrb[0].mxu0
    %v146 = vadd.f32 %v109, %v145
    %v147 = vpop.f32.mrb[0].mxu0
    %v148 = vpop.f32.mrb[0].mxu0
    %v149 = vadd.f32 %v109, %v148
    %v150 = vpop.f32.mrb[0].mxu0
    %151 = vmatprep.mubr.bf16.mxu0 0
    %152 = vmatmul.mubr.bf16.gmra.mrb[0].mxu0 %v73
    %v153 = vpop.f32.mrb[0].mxu0
    %v154 = vadd.f32 %v109, %v153
    %v155 = vpop.f32.mrb[0].mxu0
    %v156 = vpop.f32.mrb[0].mxu0
    %v157 = vadd.f32 %v109, %v156
    %v158 = vpop.f32.mrb[0].mxu0
    %159 = vmatprep.mubr.bf16.mxu0 0
    %160 = vmatmul.mubr.bf16.gmra.mrb[0].mxu0 %v74
    %v161 = vpop.f32.mrb[0].mxu0
    %v162 = vadd.f32 %v109, %v161
    %v163 = vpop.f32.mrb[0].mxu0
    %v164 = vpop.f32.mrb[0].mxu0
    %v165 = vadd.f32 %v109, %v164
    %v166 = vpop.f32.mrb[0].mxu0
    %167 = vmatprep.mubr.bf16.mxu0 0
    %168 = vmatmul.mubr.bf16.gmra.mrb[0].mxu0 %v75
    %v169 = vpop.f32.mrb[0].mxu0
    %v170 = vadd.f32 %v109, %v169
    %v171 = vpop.f32.mrb[0].mxu0
    %v172 = vpop.f32.mrb[0].mxu0
    %v173 = vadd.f32 %v109, %v172
    %v174 = vpop.f32.mrb[0].mxu0
    %175 = vmatprep.mubr.bf16.mxu0 0
    %176 = vmatmul.mubr.bf16.gmra.mrb[0].mxu0 %v76
    %v177 = vpop.f32.mrb[0].mxu0
    %v178 = vadd.f32 %v109, %v177
    %v179 = vpop.f32.mrb[0].mxu0
    %v180 = vpop.f32.mrb[0].mxu0
    %v181 = vadd.f32 %v109, %v180
    %v182 = vpop.f32.mrb[0].mxu0
    %183 = vmatprep.mubr.bf16.mxu0 0
    %184 = vmatmul.mubr.bf16.gmra.mrb[0].mxu0 %v77
    %v185 = vpop.f32.mrb[0].mxu0
    %v186 = vadd.f32 %v109, %v185
    %v187 = vpop.f32.mrb[0].mxu0
    %v188 = vpop.f32.mrb[0].mxu0
    %v189 = vadd.f32 %v109, %v188
    %v190 = vpop.f32.mrb[0].mxu0
    %191 = vmatprep.mubr.bf16.mxu0 0
    %192 = vmatmul.mubr.bf16.gmra.mrb[0].mxu0 %v78
    %v193 = vpop.f32.mrb[0].mxu0
    %v194 = vadd.f32 %v109, %v193
    %v195 = vpop.f32.mrb[0].mxu0
    %v196 = vpop.f32.mrb[0].mxu0
    %v197 = vadd.f32 %v109, %v196
    %v198 = vpop.f32.mrb[0].mxu0
    %199 = vmatprep.mubr.bf16.mxu0 0
    %200 = vmatmul.mubr.bf16.gmra.mrb[0].mxu0 %v79
    %v201 = vpop.f32.mrb[0].mxu0
    %v202 = vadd.f32 %v109, %v201
    %v203 = vpop.f32.mrb[0].mxu0
    %v204 = vpop.f32.mrb[0].mxu0
    %v205 = vadd.f32 %v109, %v204
    %v206 = vpop.f32.mrb[0].mxu0
    %207 = vdwg.mxu0
    %v208 = vtanh.pop %v146
    %v209 = vtanh.pop %v149
    %v210 = vtanh.pop %v154
    %v211 = vtanh.pop %v157
    %v212 = vtanh.pop %v162
    %v213 = vtanh.pop %v165
    %v214 = vtanh.pop %v170
    %v215 = vtanh.pop %v173
    %v216 = vtanh.pop %v178
    %v217 = vtanh.pop %v181
    %v218 = vtanh.pop %v186
    %v219 = vtanh.pop %v189
    %v220 = vtanh.pop %v194
    %v221 = vtanh.pop %v197
    %v222 = vtanh.pop %v202
    %v223 = vtanh.pop %v205
    %v224 = vld [vmem:[%s5] sm:$0x1]
    %v226 = vlaneseq
    %v227 = vshrl.u32 %v226, 7
    %v228 = vsub.s32 0, %v227
    %v229 = vrot.slane %v224, %v228
    %v231 = vmul.f32 %v208, %v229
    %v232 = vmul.f32 %v209, %v229
    %v233 = vmul.f32 %v210, %v229
    %v234 = vmul.f32 %v211, %v229
    %v235 = vmul.f32 %v212, %v229
    %v236 = vmul.f32 %v213, %v229
    %v237 = vmul.f32 %v214, %v229
    %v238 = vmul.f32 %v215, %v229
    %v239 = vmul.f32 %v216, %v229
    %v240 = vmul.f32 %v217, %v229
    %v241 = vmul.f32 %v218, %v229
    %v242 = vmul.f32 %v219, %v229
    %v243 = vmul.f32 %v220, %v229
    %v244 = vmul.f32 %v221, %v229
    %v245 = vmul.f32 %v222, %v229
    %v246 = vmul.f32 %v223, %v229
    %247 = vadd.xlane.f32.xlu0 %v231
    %v248 = vpop.xlane.xlu0 %247
    %249 = vadd.xlane.f32.xlu0 %v232
    %v250 = vpop.xlane.xlu0 %249
    %251 = vadd.xlane.f32.xlu0 %v233
    %v252 = vpop.xlane.xlu0 %251
    %253 = vadd.xlane.f32.xlu0 %v234
    %v254 = vpop.xlane.xlu0 %253
    %255 = vadd.xlane.f32.xlu0 %v235
    %v256 = vpop.xlane.xlu0 %255
    %257 = vadd.xlane.f32.xlu0 %v236
    %v258 = vpop.xlane.xlu0 %257
    %259 = vadd.xlane.f32.xlu0 %v237
    %v260 = vpop.xlane.xlu0 %259
    %261 = vadd.xlane.f32.xlu0 %v238
    %v262 = vpop.xlane.xlu0 %261
    %263 = vadd.xlane.f32.xlu0 %v239
    %v264 = vpop.xlane.xlu0 %263
    %265 = vadd.xlane.f32.xlu0 %v240
    %v266 = vpop.xlane.xlu0 %265
    %267 = vadd.xlane.f32.xlu0 %v241
    %v268 = vpop.xlane.xlu0 %267
    %269 = vadd.xlane.f32.xlu0 %v242
    %v270 = vpop.xlane.xlu0 %269
    %271 = vadd.xlane.f32.xlu0 %v243
    %v272 = vpop.xlane.xlu0 %271
    %273 = vadd.xlane.f32.xlu0 %v244
    %v274 = vpop.xlane.xlu0 %273
    %275 = vadd.xlane.f32.xlu0 %v245
    %v276 = vpop.xlane.xlu0 %275
    %277 = vadd.xlane.f32.xlu0 %v246
    %v278 = vpop.xlane.xlu0 %277
    %v279 = vlaneseq
    %v280 = vand.u32 %v279, 127
    %281 = vset.pattern.permute.xlu0 0
    %282 = vperm.xlu0 %281, %v56
    %v283 = vpop.permute.xlu0 %282
    %284 = vset.pattern.permute.xlu0 0
    %285 = vperm.xlu0 %284, %v57
    %v286 = vpop.permute.xlu0 %285
    %287 = vset.pattern.permute.xlu0 0
    %288 = vperm.xlu0 %287, %v58
    %v289 = vpop.permute.xlu0 %288
    %290 = vset.pattern.permute.xlu0 0
    %291 = vperm.xlu0 %290, %v59
    %v292 = vpop.permute.xlu0 %291
    %293 = vset.pattern.permute.xlu0 0
    %294 = vperm.xlu0 %293, %v60
    %v295 = vpop.permute.xlu0 %294
    %296 = vset.pattern.permute.xlu0 0
    %297 = vperm.xlu0 %296, %v61
    %v298 = vpop.permute.xlu0 %297
    %299 = vset.pattern.permute.xlu0 0
    %300 = vperm.xlu0 %299, %v62
    %v301 = vpop.permute.xlu0 %300
    %302 = vset.pattern.permute.xlu0 0
    %303 = vperm.xlu0 %302, %v63
    %v304 = vpop.permute.xlu0 %303
    %305 = vset.pattern.permute.xlu0 0
    %306 = vperm.xlu0 %305, %v64
    %v307 = vpop.permute.xlu0 %306
    %308 = vset.pattern.permute.xlu0 0
    %309 = vperm.xlu0 %308, %v65
    %v310 = vpop.permute.xlu0 %309
    %311 = vset.pattern.permute.xlu0 0
    %312 = vperm.xlu0 %311, %v66
    %v313 = vpop.permute.xlu0 %312
    %314 = vset.pattern.permute.xlu0 0
    %315 = vperm.xlu0 %314, %v67
    %v316 = vpop.permute.xlu0 %315
    %317 = vset.pattern.permute.xlu0 0
    %318 = vperm.xlu0 %317, %v68
    %v319 = vpop.permute.xlu0 %318
    %320 = vset.pattern.permute.xlu0 0
    %321 = vperm.xlu0 %320, %v69
    %v322 = vpop.permute.xlu0 %321
    %323 = vset.pattern.permute.xlu0 0
    %324 = vperm.xlu0 %323, %v70
    %v325 = vpop.permute.xlu0 %324
    %326 = vset.pattern.permute.xlu0 0
    %327 = vperm.xlu0 %326, %v71
    %v328 = vpop.permute.xlu0 %327
    %vm329 = vcmp.eq.s32.totalorder %v283, %v280
    %vm330 = vcmp.eq.s32.totalorder %v286, %v280
    %vm331 = vcmp.eq.s32.totalorder %v289, %v280
    %vm332 = vcmp.eq.s32.totalorder %v292, %v280
    %vm333 = vcmp.eq.s32.totalorder %v295, %v280
    %vm334 = vcmp.eq.s32.totalorder %v298, %v280
    %vm335 = vcmp.eq.s32.totalorder %v301, %v280
    %vm336 = vcmp.eq.s32.totalorder %v304, %v280
    %vm337 = vcmp.eq.s32.totalorder %v307, %v280
    %vm338 = vcmp.eq.s32.totalorder %v310, %v280
    %vm339 = vcmp.eq.s32.totalorder %v313, %v280
    %vm340 = vcmp.eq.s32.totalorder %v316, %v280
    %vm341 = vcmp.eq.s32.totalorder %v319, %v280
    %vm342 = vcmp.eq.s32.totalorder %v322, %v280
    %vm343 = vcmp.eq.s32.totalorder %v325, %v280
    %vm344 = vcmp.eq.s32.totalorder %v328, %v280
    %v345 = vsel %vm329, %v248, -1e+30
    %v346 = vsel %vm330, %v250, -1e+30
    %v347 = vsel %vm331, %v252, -1e+30
    %v348 = vsel %vm332, %v254, -1e+30
    %v349 = vsel %vm333, %v256, -1e+30
    %v350 = vsel %vm334, %v258, -1e+30
    %v351 = vsel %vm335, %v260, -1e+30
    %v352 = vsel %vm336, %v262, -1e+30
    %v353 = vsel %vm337, %v264, -1e+30
    %v354 = vsel %vm338, %v266, -1e+30
    %v355 = vsel %vm339, %v268, -1e+30
    %v356 = vsel %vm340, %v270, -1e+30
    %v357 = vsel %vm341, %v272, -1e+30
    %v358 = vsel %vm342, %v274, -1e+30
    %v359 = vsel %vm343, %v276, -1e+30
    %v360 = vsel %vm344, %v278, -1e+30
    %vm361 = vcmask 64512
    %v362 = vsel %vm361, %v345, -inf
    %v363 = vsel %vm361, %v346, -inf
    %v364 = vsel %vm361, %v347, -inf
    %v365 = vsel %vm361, %v348, -inf
    %v366 = vsel %vm361, %v349, -inf
    %v367 = vmax.f32 %v362, %v366
    %v368 = vsel %vm361, %v350, -inf
    %v369 = vmax.f32 %v363, %v368
    %v370 = vsel %vm361, %v351, -inf
    %v371 = vmax.f32 %v364, %v370
    %v372 = vsel %vm361, %v352, -inf
    %v373 = vmax.f32 %v365, %v372
    %v374 = vsel %vm361, %v353, -inf
    %v375 = vmax.f32 %v367, %v374
    %v376 = vsel %vm361, %v354, -inf
    %v377 = vmax.f32 %v369, %v376
    %v378 = vsel %vm361, %v355, -inf
    %v379 = vmax.f32 %v371, %v378
    %v380 = vsel %vm361, %v356, -inf
    %v381 = vmax.f32 %v373, %v380
    %v382 = vsel %vm361, %v357, -inf
    %v383 = vmax.f32 %v375, %v382
    %v384 = vsel %vm361, %v358, -inf
    %v385 = vmax.f32 %v377, %v384
    %v386 = vsel %vm361, %v359, -inf
    %v387 = vmax.f32 %v379, %v386
    %v388 = vsel %vm361, %v360, -inf
    %v389 = vmax.f32 %v381, %v388
    %v390 = vmax.f32 %v383, %v385
    %v391 = vmax.f32 %v387, %v389
    %v392 = vmax.f32 %v390, %v391
    %v393 = vrot.slane %v392, 4
    %v394 = vmax.f32 %v392, %v393
    %v395 = vrot.slane %v394, 2
    %v396 = vmax.f32 %v394, %v395
    %v397 = vrot.slane %v396, 1
    %v398 = vmax.f32 %v396, %v397
    %v399 = vsub.f32 %v248, %v398
    %v400 = vsub.f32 %v250, %v398
    %v401 = vsub.f32 %v252, %v398
    %v402 = vsub.f32 %v254, %v398
    %v403 = vsub.f32 %v256, %v398
    %v404 = vsub.f32 %v258, %v398
    %v405 = vsub.f32 %v260, %v398
    %v406 = vsub.f32 %v262, %v398
    %v407 = vsub.f32 %v264, %v398
    %v408 = vsub.f32 %v266, %v398
    %v409 = vsub.f32 %v268, %v398
    %v410 = vsub.f32 %v270, %v398
    %v411 = vsub.f32 %v272, %v398
    %v412 = vsub.f32 %v274, %v398
    %v413 = vsub.f32 %v276, %v398
    %v414 = vsub.f32 %v278, %v398
    %v415 = vmin.f32 %v399, 0.0
    %v416 = vmin.f32 %v400, 0.0
    %v417 = vmin.f32 %v401, 0.0
    %v418 = vmin.f32 %v402, 0.0
    %v419 = vmin.f32 %v403, 0.0
    %v420 = vmin.f32 %v404, 0.0
    %v421 = vmin.f32 %v405, 0.0
    %v422 = vmin.f32 %v406, 0.0
    %v423 = vmin.f32 %v407, 0.0
    %v424 = vmin.f32 %v408, 0.0
    %v425 = vmin.f32 %v409, 0.0
    %v426 = vmin.f32 %v410, 0.0
    %v427 = vmin.f32 %v411, 0.0
    %v428 = vmin.f32 %v412, 0.0
    %v429 = vmin.f32 %v413, 0.0
    %v430 = vmin.f32 %v414, 0.0
    %v431 = vmul.f32 %v415, 1.442695
    %v432 = vpow.pop %v431
    %v433 = vmul.f32 %v416, 1.442695
    %v434 = vpow.pop %v433
    %v435 = vmul.f32 %v417, 1.442695
    %v436 = vpow.pop %v435
    %v437 = vmul.f32 %v418, 1.442695
    %v438 = vpow.pop %v437
    %v439 = vmul.f32 %v419, 1.442695
    %v440 = vpow.pop %v439
    %v441 = vmul.f32 %v420, 1.442695
    %v442 = vpow.pop %v441
    %v443 = vmul.f32 %v421, 1.442695
    %v444 = vpow.pop %v443
    %v445 = vmul.f32 %v422, 1.442695
    %v446 = vpow.pop %v445
    %v447 = vmul.f32 %v423, 1.442695
    %v448 = vpow.pop %v447
    %v449 = vmul.f32 %v424, 1.442695
    %v450 = vpow.pop %v449
    %v451 = vmul.f32 %v425, 1.442695
    %v452 = vpow.pop %v451
    %v453 = vmul.f32 %v426, 1.442695
    %v454 = vpow.pop %v453
    %v455 = vmul.f32 %v427, 1.442695
    %v456 = vpow.pop %v455
    %v457 = vmul.f32 %v428, 1.442695
    %v458 = vpow.pop %v457
    %v459 = vmul.f32 %v429, 1.442695
    %v460 = vpow.pop %v459
    %v461 = vmul.f32 %v430, 1.442695
    %v462 = vpow.pop %v461
    %v463 = vsel %vm329, %v432, 0.0
    %v464 = vsel %vm330, %v434, 0.0
    %v465 = vsel %vm331, %v436, 0.0
    %v466 = vsel %vm332, %v438, 0.0
    %v467 = vsel %vm333, %v440, 0.0
    %v468 = vsel %vm334, %v442, 0.0
    %v469 = vsel %vm335, %v444, 0.0
    %v470 = vsel %vm336, %v446, 0.0
    %v471 = vsel %vm337, %v448, 0.0
    %v472 = vsel %vm338, %v450, 0.0
    %v473 = vsel %vm339, %v452, 0.0
    %v474 = vsel %vm340, %v454, 0.0
    %v475 = vsel %vm341, %v456, 0.0
    %v476 = vsel %vm342, %v458, 0.0
    %v477 = vsel %vm343, %v460, 0.0
    %v478 = vsel %vm344, %v462, 0.0
    %v479 = vsel %vm361, %v463, 0.0
    %v480 = vsel %vm361, %v464, 0.0
    %v481 = vadd.f32 %v479, %v480
    %v482 = vsel %vm361, %v465, 0.0
    %v483 = vadd.f32 %v481, %v482
    %v484 = vsel %vm361, %v466, 0.0
    %v485 = vadd.f32 %v483, %v484
    %v486 = vsel %vm361, %v467, 0.0
    %v487 = vadd.f32 %v485, %v486
    %v488 = vsel %vm361, %v468, 0.0
    %v489 = vadd.f32 %v487, %v488
    %v490 = vsel %vm361, %v469, 0.0
    %v491 = vadd.f32 %v489, %v490
    %v492 = vsel %vm361, %v470, 0.0
    %v493 = vadd.f32 %v491, %v492
    %v494 = vsel %vm361, %v471, 0.0
    %v495 = vadd.f32 %v493, %v494
    %v496 = vsel %vm361, %v472, 0.0
    %v497 = vadd.f32 %v495, %v496
    %v498 = vsel %vm361, %v473, 0.0
    %v499 = vadd.f32 %v497, %v498
    %v500 = vsel %vm361, %v474, 0.0
    %v501 = vadd.f32 %v499, %v500
    %v502 = vsel %vm361, %v475, 0.0
    %v503 = vadd.f32 %v501, %v502
    %v504 = vsel %vm361, %v476, 0.0
    %v505 = vadd.f32 %v503, %v504
    %v506 = vsel %vm361, %v477, 0.0
    %v507 = vadd.f32 %v505, %v506
    %v508 = vsel %vm361, %v478, 0.0
    %v509 = vadd.f32 %v507, %v508
    %v510 = vrot.slane %v509, 4
    %v511 = vadd.f32 %v509, %v510
    %v512 = vrot.slane %v511, 2
    %v513 = vadd.f32 %v511, %v512
    %v514 = vrot.slane %v513, 1
    %v515 = vadd.f32 %v513, %v514
    %v516 = vmax.f32 %v515, 1e-30
    %v517 = vrcp.pop %v516
    %v518 = vmul.f32 %v463, %v517
    %v519 = vmul.f32 %v464, %v517
    %v520 = vmul.f32 %v465, %v517
    %v521 = vmul.f32 %v466, %v517
    %v522 = vmul.f32 %v467, %v517
    %v523 = vmul.f32 %v468, %v517
    %v524 = vmul.f32 %v469, %v517
    %v525 = vmul.f32 %v470, %v517
    %v526 = vmul.f32 %v471, %v517
    %v527 = vmul.f32 %v472, %v517
    %v528 = vmul.f32 %v473, %v517
    %v529 = vmul.f32 %v474, %v517
    %v530 = vmul.f32 %v475, %v517
    %v531 = vmul.f32 %v476, %v517
    %v532 = vmul.f32 %v477, %v517
    %v533 = vmul.f32 %v478, %v517
    %v534 = vsel %vm361, %v518, 0.0
    %535 = vadd.xlane.f32.xlu0 %v534
    %v536 = vpop.xlane.xlu0 %535
    %v537 = vsel %vm361, %v519, 0.0
    %538 = vadd.xlane.f32.xlu0 %v537
    %v539 = vpop.xlane.xlu0 %538
    %v540 = vsel %vm361, %v520, 0.0
    %541 = vadd.xlane.f32.xlu0 %v540
    %v542 = vpop.xlane.xlu0 %541
    %v543 = vsel %vm361, %v521, 0.0
    %544 = vadd.xlane.f32.xlu0 %v543
    %v545 = vpop.xlane.xlu0 %544
    %v546 = vsel %vm361, %v522, 0.0
    %547 = vadd.xlane.f32.xlu0 %v546
    %v548 = vpop.xlane.xlu0 %547
    %v549 = vsel %vm361, %v523, 0.0
    %550 = vadd.xlane.f32.xlu0 %v549
    %v551 = vpop.xlane.xlu0 %550
    %v552 = vsel %vm361, %v524, 0.0
    %553 = vadd.xlane.f32.xlu0 %v552
    %v554 = vpop.xlane.xlu0 %553
    %v555 = vsel %vm361, %v525, 0.0
    %556 = vadd.xlane.f32.xlu0 %v555
    %v557 = vpop.xlane.xlu0 %556
    %v558 = vsel %vm361, %v526, 0.0
    %559 = vadd.xlane.f32.xlu0 %v558
    %v560 = vpop.xlane.xlu0 %559
    %v561 = vsel %vm361, %v527, 0.0
    %562 = vadd.xlane.f32.xlu0 %v561
    %v563 = vpop.xlane.xlu0 %562
    %v564 = vsel %vm361, %v528, 0.0
    %565 = vadd.xlane.f32.xlu0 %v564
    %v566 = vpop.xlane.xlu0 %565
    %v567 = vsel %vm361, %v529, 0.0
    %568 = vadd.xlane.f32.xlu0 %v567
    %v569 = vpop.xlane.xlu0 %568
    %v570 = vsel %vm361, %v530, 0.0
    %571 = vadd.xlane.f32.xlu0 %v570
    %v572 = vpop.xlane.xlu0 %571
    %v573 = vsel %vm361, %v531, 0.0
    %574 = vadd.xlane.f32.xlu0 %v573
    %v575 = vpop.xlane.xlu0 %574
    %v576 = vsel %vm361, %v532, 0.0
    %577 = vadd.xlane.f32.xlu0 %v576
    %v578 = vpop.xlane.xlu0 %577
    %v579 = vsel %vm361, %v533, 0.0
    %580 = vadd.xlane.f32.xlu0 %v579
    %v581 = vpop.xlane.xlu0 %580
    %v582 = vlaneseq
    %v583 = vshrl.u32 %v582, 7
    %v584 = vlaneseq
    %v585 = vshrl.u32 %v584, 7
    %v586 = vsub.s32 0, %v585
    %v587 = vrot.slane %v55, %v586
    %vm588 = vcmp.eq.s32.totalorder %v587, %v583
    %v589 = vsel %vm588, 1, 0
    %v590 = vcvt.s32.f32 %v589
    %v591 = vpack.c.bf16 %v590, %v590
    %v592 = vmul.f32 %v536, %v39
    %v593 = vmul.f32 %v539, %v40
    %v594 = vmul.f32 %v542, %v41
    %v595 = vmul.f32 %v545, %v42
    %v596 = vmul.f32 %v548, %v43
    %v597 = vmul.f32 %v551, %v44
    %v598 = vmul.f32 %v554, %v45
    %v599 = vmul.f32 %v557, %v46
    %v600 = vmul.f32 %v560, %v47
    %v601 = vmul.f32 %v563, %v48
    %v602 = vmul.f32 %v566, %v49
    %v603 = vmul.f32 %v569, %v50
    %v604 = vmul.f32 %v572, %v51
    %v605 = vmul.f32 %v575, %v52
    %v606 = vmul.f32 %v578, %v53
    %v607 = vmul.f32 %v581, %v54
    %v608 = vpack.c.bf16 %v593, %v592
    %v609 = vpack.c.bf16 %v595, %v594
    %v610 = vpack.c.bf16 %v597, %v596
    %v611 = vpack.c.bf16 %v599, %v598
    %v612 = vpack.c.bf16 %v601, %v600
    %v613 = vpack.c.bf16 %v603, %v602
    %v614 = vpack.c.bf16 %v605, %v604
    %v615 = vpack.c.bf16 %v607, %v606
    %616 = vmatprep.subr.bf16.mxu0 0
    %617 = vmatpush1.bf16.msra.mxu0 %v608
    %618 = vmatprep.subr.bf16.mxu0 0
    %619 = vmatpush1.bf16.msra.mxu0 %v609
    %620 = vmatprep.subr.bf16.mxu0 0
    %621 = vmatpush1.bf16.msra.mxu0 %v610
    %622 = vmatprep.subr.bf16.mxu0 0
    %623 = vmatpush1.bf16.msra.mxu0 %v611
    %624 = vmatprep.subr.bf16.mxu0 0
    %625 = vmatpush1.bf16.msra.mxu0 %v612
    %626 = vmatprep.subr.bf16.mxu0 0
    %627 = vmatpush1.bf16.msra.mxu0 %v613
    %628 = vmatprep.subr.bf16.mxu0 0
    %629 = vmatpush1.bf16.msra.mxu0 %v614
    %630 = vmatprep.subr.bf16.mxu0 0
    %631 = vmatpush1.bf16.msra.mxu0 %v615
    %632 = vmatprep.subr.bf16.mxu0 0
    %633 = vmatpush1.bf16.msra.mxu0 0
    %634 = vmatprep.subr.bf16.mxu0 0
    %635 = vmatpush1.bf16.msra.mxu0 0
    %636 = vmatprep.subr.bf16.mxu0 0
    %637 = vmatpush1.bf16.msra.mxu0 0
    %638 = vmatprep.subr.bf16.mxu0 0
    %639 = vmatpush1.bf16.msra.mxu0 0
    %640 = vmatprep.subr.bf16.mxu0 0
    %641 = vmatpush1.bf16.msra.mxu0 0
    %642 = vmatprep.subr.bf16.mxu0 0
    %643 = vmatpush1.bf16.msra.mxu0 0
    %644 = vmatprep.subr.bf16.mxu0 0
    %645 = vmatpush1.bf16.msra.mxu0 0
    %646 = vmatprep.subr.bf16.mxu0 0
    %647 = vmatpush1.bf16.msra.mxu0 0
    %648 = vmatprep.mubr.bf16.mxu0 0
    %649 = vmatmul.mubr.bf16.gmra.mrb[0].mxu0 %v591
    %v650 = vpop.f32.mrb[0].mxu0
    %v651 = vadd.f32 0.0, %v650
    %v652 = vpop.f32.mrb[0].mxu0
    %v653 = vpop.f32.mrb[0].mxu0
    %v654 = vpop.f32.mrb[0].mxu0
    %655 = vdwg.mxu0
    %656 = vst [vmem:[#allocation5] sm:$0xff] %v651
    // Predicated region
    $region30: #{tpu_custom_call.1} parent=1 // pred_check
      _
    $region31: #{tpu_custom_call.1} parent=1 // pred_check_branch
      %658 = sbr.rel (0) target = $region33
    $region32: #{tpu_custom_call.1} parent=1 // pred_region
      %s660 = ssub.s32 128, 128
      %661 = vsyncadd [#allocation4], %s660
      %s663 = sshll.u32 [#allocation5], 4
      %s664 = int_to_ptr.vmem [resolvable:$true] %s663
      %666 = dma.vmem_to_hbm [thread:$0]  %s664, 128, %s6, [#allocation4]
    $region33: #{tpu_custom_call.1} parent=1 // pred_fallthru
      _
    // Predicated region
    $region34: #{tpu_custom_call.1} parent=1 // pred_check
      _
    $region35: #{tpu_custom_call.1} parent=1 // pred_check_branch
      %668 = sbr.rel (0) target = $region37
    $region36: #{tpu_custom_call.1} parent=1 // pred_region
      %669 = dma.done [#allocation4], 128
    $region37: #{tpu_custom_call.1} parent=1 // pred_fallthru
      _
    %670 = vsyncpa [#allocation3], 1
    %671 = vsyncpa [#allocation4], 1

</llo_original>
